<compile_context>
chip_gen: v6e
topology: v6e:2x2x1
jax: 0.10.0
libtpu: 0.0.40
codegen_flags: <defaults>
</compile_context>

<pallas_src>
import numpy as np
import jax
import jax.numpy as jnp
from jax import lax
from jax.experimental import pallas as pl
from jax.experimental.pallas import tpu as pltpu


def _merge_kernel(idx_ref, patch_ref, inv_ref, out_ref):
    """Scatter-add a block of patches into the per-(b, c-block) canvas, then average.

    idx_ref   : SMEM (B, P_pad, 2) int32 scalar-prefetch ref — clamped (row, col).
    patch_ref : VMEM (1, P_BLK, PH, PW, C_BLK) — current block of patches.
    inv_ref   : VMEM (1, IH, IW, 1)  — precomputed 1/coverage (0 where uncovered).
    out_ref   : VMEM (1, IH, IW, C_BLK) — canvas accumulator, resident across the
                P grid axis (same block index for every p step).
    """
    b = pl.program_id(0)
    pb = pl.program_id(2)
    p_blk = patch_ref.shape[1]
    PH, PW = patch_ref.shape[2], patch_ref.shape[3]

    @pl.when(pb == 0)
    def _init():
        out_ref[...] = jnp.zeros_like(out_ref)

    def body(i, carry):
        p = pb * p_blk + i
        y = idx_ref[b, p, 0]
        x = idx_ref[b, p, 1]
        patch = patch_ref[0, i]                                   # (PH, PW, C_BLK)
        cur = out_ref[0, pl.ds(y, PH), pl.ds(x, PW), :]
        out_ref[0, pl.ds(y, PH), pl.ds(x, PW), :] = cur + patch
        return carry

    lax.fori_loop(0, p_blk, body, 0, unroll=True)

    @pl.when(pb == pl.num_programs(2) - 1)
    def _finalize():
        out_ref[...] = out_ref[...] * inv_ref[...]


def merge_patches(voxel_tensor, batch_indices, out_hw, *, p_blk=8):
    """voxel_tensor: (B, C, P, PH, PW) f32; batch_indices: (B, P, 2) int.

    Returns merged images (B, C, IH, IW) f32 (matching the PyTorch NCHW output).
    """
    B, C, P, PH, PW = voxel_tensor.shape
    IH, IW = out_hw

    # ---- glue: layout + data-independent precompute (plain XLA, outside kernel) ----
    # Channels-last patches (same permute the PyTorch module does).
    x = jnp.transpose(voxel_tensor, (0, 2, 3, 4, 1)).astype(jnp.float32)  # (B,P,PH,PW,C)

    # Clamp corners so in-kernel dynamic-slice stores are always in bounds.
    idx = batch_indices.astype(jnp.int32)
    y = jnp.clip(idx[..., 0], 0, IH - PH)                  # (B, P)
    xcol = jnp.clip(idx[..., 1], 0, IW - PW)               # (B, P)
    idx_clamped = jnp.stack([y, xcol], axis=-1)            # (B, P, 2)

    # Precompute inverse coverage count (independent of the patch data).
    rows = jnp.arange(IH, dtype=jnp.int32)
    cols = jnp.arange(IW, dtype=jnp.int32)
    row_cov = ((rows[None, None, :] >= y[..., None]) &
               (rows[None, None, :] < y[..., None] + PH)).astype(jnp.float32)     # (B,P,IH)
    col_cov = ((cols[None, None, :] >= xcol[..., None]) &
               (cols[None, None, :] < xcol[..., None] + PW)).astype(jnp.float32)  # (B,P,IW)
    cnt = jnp.einsum('bph,bpw->bhw', row_cov, col_cov)                            # (B,IH,IW)
    inv_cnt = jnp.where(cnt > 0.0, 1.0 / jnp.maximum(cnt, 1.0), 0.0)[..., None]   # (B,IH,IW,1)

    # Pad P up to a multiple of p_blk; padded patches are zero at corner (0, 0),
    # so they add nothing and do not affect the precomputed counts.
    p_blk = min(p_blk, max(P, 1))
    P_pad = pl.cdiv(P, p_blk) * p_blk
    if P_pad != P:
        x = jnp.pad(x, ((0, 0), (0, P_pad - P), (0, 0), (0, 0), (0, 0)))
        idx_clamped = jnp.pad(idx_clamped, ((0, 0), (0, P_pad - P), (0, 0)))

    # Block C so the resident canvas fits VMEM (important on v7x's 64 MiB).
    c_blk = 128 if (C % 128 == 0 and C > 128) else C

    # Explicit VMEM budget: out + inv blocks (double-buffered across b/c changes)
    # plus double-buffered patch blocks, with slack for compiler scratch.
    vmem_bytes = 4 * (2 * IH * IW * (c_blk + 1) + 2 * p_blk * PH * PW * c_blk) + (2 << 20)
    vmem_limit = int(min(max(vmem_bytes, 32 << 20), 64 << 20))

    out = pl.pallas_call(
        _merge_kernel,
        out_shape=jax.ShapeDtypeStruct((B, IH, IW, C), jnp.float32),
        grid_spec=pltpu.PrefetchScalarGridSpec(
            num_scalar_prefetch=1,                       # clamped corners -> SMEM
            grid=(B, C // c_blk, P_pad // p_blk),        # P (reduction) axis last
            in_specs=[
                pl.BlockSpec((1, p_blk, PH, PW, c_blk),
                             lambda b, c, p, idx_ref: (b, p, 0, 0, c)),
                pl.BlockSpec((1, IH, IW, 1),
                             lambda b, c, p, idx_ref: (b, 0, 0, 0)),
            ],
            out_specs=pl.BlockSpec((1, IH, IW, c_blk),
                                   lambda b, c, p, idx_ref: (b, 0, 0, c)),
        ),
        compiler_params=pltpu.CompilerParams(
            dimension_semantics=("parallel", "parallel", "arbitrary"),
            vmem_limit_bytes=vmem_limit),
    )(idx_clamped, x, inv_cnt)

    # Glue: back to the module's NCHW output layout.
    return jnp.transpose(out, (0, 3, 1, 2))


def _reference(voxels_nchw, indices, IH, IW):
    """Pure-numpy reference of the assumed merge_batch(mode='avg') semantics."""
    B, C, P, PH, PW = voxels_nchw.shape
    x = np.transpose(voxels_nchw, (0, 2, 3, 4, 1)).astype(np.float32)
    out = np.zeros((B, IH, IW, C), np.float32)
    cnt = np.zeros((B, IH, IW, C), np.float32)
    for b in range(B):
        for p in range(P):
            y, xx = int(indices[b, p, 0]), int(indices[b, p, 1])
            out[b, y:y + PH, xx:xx + PW, :] += x[b, p]
            cnt[b, y:y + PH, xx:xx + PW, :] += 1.0
    out = np.where(cnt > 0, out / np.maximum(cnt, 1.0), 0.0)
    return np.transpose(out, (0, 3, 1, 2))


if __name__ == "__main__":
    B, C, P, PH, PW = 2, 8, 5, 8, 8
    IH, IW = 16, 16

    key = jax.random.PRNGKey(0)
    voxel_tensor = jax.random.normal(key, (B, C, P, PH, PW), dtype=jnp.float32)

    # Deterministic patch corners: a 2x2 non-overlapping grid plus one extra
    # overlapping patch per image (exercises the 'avg' merge).
    batch_indices = jnp.array(
        [[[0, 0], [0, 8], [8, 0], [8, 8], [4, 4]],
         [[0, 0], [0, 8], [8, 0], [8, 8], [6, 2]]],
        dtype=jnp.int32)

    merged = merge_patches(voxel_tensor, batch_indices, (IH, IW))
    merged = jax.block_until_ready(merged)

    ref = _reference(np.asarray(voxel_tensor), np.asarray(batch_indices), IH, IW)
    np.testing.assert_allclose(np.asarray(merged), ref, rtol=1e-5, atol=1e-5)

    print("KERNEL_OK")
</pallas_src>

<mosaic_0001>
module attributes {stable_mosaic.version = 11 : i64} {
  func.func @_merge_kernel(%arg0: i32, %arg1: i32, %arg2: i32, %arg3: memref<2x5x2xi32, #tpu.memory_space<smem>>, %arg4: memref<1x5x8x8x8xf32, #tpu.memory_space<vmem>>, %arg5: memref<1x16x16x1xf32, #tpu.memory_space<vmem>>, %arg6: memref<1x16x16x8xf32, #tpu.memory_space<vmem>>) attributes {dimension_semantics = [#tpu.dimension_semantics<parallel>, #tpu.dimension_semantics<parallel>, #tpu.dimension_semantics<arbitrary>], iteration_bounds = array<i64: 2, 1, 1>, scalar_prefetch = 1 : i64, scratch_operands = 0 : i64, tpu.core_type = #tpu.core_type<tc>, window_params = [{transform_indices = @transform_0, window_bounds = array<i64: 1, 5, 8, 8, 8>}, {transform_indices = @transform_1, window_bounds = array<i64: 1, 16, 16, 1>}, {transform_indices = @transform_2, window_bounds = array<i64: 1, 16, 16, 8>}]} {
    %c0_i32 = arith.constant 0 : i32
    %0 = arith.cmpi eq, %arg2, %c0_i32 : i32
    %1 = arith.extui %0 : i1 to i32
    %c0_i32_0 = arith.constant 0 : i32
    %2 = arith.cmpi ne, %1, %c0_i32_0 : i32
    scf.if %2 {
      %cst = arith.constant 0.000000e+00 : f32
      %111 = vector.broadcast %cst : f32 to vector<1x16x16x8xf32>
      %c0_57 = arith.constant 0 : index
      %c0_58 = arith.constant 0 : index
      %c0_59 = arith.constant 0 : index
      %c0_60 = arith.constant 0 : index
      %112 = vector.load %arg6[%c0_57, %c0_58, %c0_59, %c0_60] : memref<1x16x16x8xf32, #tpu.memory_space<vmem>>, vector<1x16x16x8xf32>
      tpu.vector_store %arg6[%c0_57, %c0_58, %c0_59, %c0_60], %111 {strides = array<i32>} : memref<1x16x16x8xf32, #tpu.memory_space<vmem>>, vector<1x16x16x8xf32>,
    } else {
    }
    %c0_i32_1 = arith.constant 0 : i32
    %c5_i32 = arith.constant 5 : i32
    %3 = arith.muli %arg2, %c5_i32 : i32
    %4 = arith.addi %3, %c0_i32_1 : i32
    %5 = arith.index_cast %arg0 : i32 to index
    %6 = arith.index_cast %4 : i32 to index
    %c0 = arith.constant 0 : index
    %7 = memref.load %arg3[%5, %6, %c0] : memref<2x5x2xi32, #tpu.memory_space<smem>>
    %8 = arith.index_cast %arg0 : i32 to index
    %9 = arith.index_cast %4 : i32 to index
    %c1 = arith.constant 1 : index
    %10 = memref.load %arg3[%8, %9, %c1] : memref<2x5x2xi32, #tpu.memory_space<smem>>
    %c0_2 = arith.constant 0 : index
    %11 = arith.index_cast %c0_i32_1 : i32 to index
    %c0_3 = arith.constant 0 : index
    %c0_4 = arith.constant 0 : index
    %c0_5 = arith.constant 0 : index
    %12 = vector.load %arg4[%c0_2, %11, %c0_3, %c0_4, %c0_5] : memref<1x5x8x8x8xf32, #tpu.memory_space<vmem>>, vector<1x1x8x8x8xf32>
    %13 = vector.shape_cast %12 : vector<1x1x8x8x8xf32> to vector<8x8x8xf32>
    %c0_6 = arith.constant 0 : index
    %14 = arith.index_cast %7 : i32 to index
    %15 = arith.index_cast %10 : i32 to index
    %c0_7 = arith.constant 0 : index
    %16 = vector.load %arg6[%c0_6, %14, %15, %c0_7] : memref<1x16x16x8xf32, #tpu.memory_space<vmem>>, vector<1x8x8x8xf32>
    %17 = vector.shape_cast %16 : vector<1x8x8x8xf32> to vector<8x8x8xf32>
    %18 = arith.addf %17, %13 : vector<8x8x8xf32>
    %c0_8 = arith.constant 0 : index
    %19 = arith.index_cast %7 : i32 to index
    %20 = arith.index_cast %10 : i32 to index
    %c0_9 = arith.constant 0 : index
    %21 = vector.load %arg6[%c0_8, %19, %20, %c0_9] : memref<1x16x16x8xf32, #tpu.memory_space<vmem>>, vector<1x8x8x8xf32>
    %22 = vector.shape_cast %21 : vector<1x8x8x8xf32> to vector<8x8x8xf32>
    %23 = vector.shape_cast %18 : vector<8x8x8xf32> to vector<1x8x8x8xf32>
    tpu.vector_store %arg6[%c0_8, %19, %20, %c0_9], %23 {strides = array<i32>} : memref<1x16x16x8xf32, #tpu.memory_space<vmem>>, vector<1x8x8x8xf32>,
    %c1_i32 = arith.constant 1 : i32
    %c5_i32_10 = arith.constant 5 : i32
    %24 = arith.muli %arg2, %c5_i32_10 : i32
    %25 = arith.addi %24, %c1_i32 : i32
    %26 = arith.index_cast %arg0 : i32 to index
    %27 = arith.index_cast %25 : i32 to index
    %c0_11 = arith.constant 0 : index
    %28 = memref.load %arg3[%26, %27, %c0_11] : memref<2x5x2xi32, #tpu.memory_space<smem>>
    %29 = arith.index_cast %arg0 : i32 to index
    %30 = arith.index_cast %25 : i32 to index
    %c1_12 = arith.constant 1 : index
    %31 = memref.load %arg3[%29, %30, %c1_12] : memref<2x5x2xi32, #tpu.memory_space<smem>>
    %c0_13 = arith.constant 0 : index
    %32 = arith.index_cast %c1_i32 : i32 to index
    %c0_14 = arith.constant 0 : index
    %c0_15 = arith.constant 0 : index
    %c0_16 = arith.constant 0 : index
    %33 = vector.load %arg4[%c0_13, %32, %c0_14, %c0_15, %c0_16] : memref<1x5x8x8x8xf32, #tpu.memory_space<vmem>>, vector<1x1x8x8x8xf32>
    %34 = vector.shape_cast %33 : vector<1x1x8x8x8xf32> to vector<8x8x8xf32>
    %c0_17 = arith.constant 0 : index
    %35 = arith.index_cast %28 : i32 to index
    %36 = arith.index_cast %31 : i32 to index
    %c0_18 = arith.constant 0 : index
    %37 = vector.load %arg6[%c0_17, %35, %36, %c0_18] : memref<1x16x16x8xf32, #tpu.memory_space<vmem>>, vector<1x8x8x8xf32>
    %38 = vector.shape_cast %37 : vector<1x8x8x8xf32> to vector<8x8x8xf32>
    %39 = arith.addf %38, %34 : vector<8x8x8xf32>
    %c0_19 = arith.constant 0 : index
    %40 = arith.index_cast %28 : i32 to index
    %41 = arith.index_cast %31 : i32 to index
    %c0_20 = arith.constant 0 : index
    %42 = vector.load %arg6[%c0_19, %40, %41, %c0_20] : memref<1x16x16x8xf32, #tpu.memory_space<vmem>>, vector<1x8x8x8xf32>
    %43 = vector.shape_cast %42 : vector<1x8x8x8xf32> to vector<8x8x8xf32>
    %44 = vector.shape_cast %39 : vector<8x8x8xf32> to vector<1x8x8x8xf32>
    tpu.vector_store %arg6[%c0_19, %40, %41, %c0_20], %44 {strides = array<i32>} : memref<1x16x16x8xf32, #tpu.memory_space<vmem>>, vector<1x8x8x8xf32>,
    %c2_i32 = arith.constant 2 : i32
    %c5_i32_21 = arith.constant 5 : i32
    %45 = arith.muli %arg2, %c5_i32_21 : i32
    %46 = arith.addi %45, %c2_i32 : i32
    %47 = arith.index_cast %arg0 : i32 to index
    %48 = arith.index_cast %46 : i32 to index
    %c0_22 = arith.constant 0 : index
    %49 = memref.load %arg3[%47, %48, %c0_22] : memref<2x5x2xi32, #tpu.memory_space<smem>>
    %50 = arith.index_cast %arg0 : i32 to index
    %51 = arith.index_cast %46 : i32 to index
    %c1_23 = arith.constant 1 : index
    %52 = memref.load %arg3[%50, %51, %c1_23] : memref<2x5x2xi32, #tpu.memory_space<smem>>
    %c0_24 = arith.constant 0 : index
    %53 = arith.index_cast %c2_i32 : i32 to index
    %c0_25 = arith.constant 0 : index
    %c0_26 = arith.constant 0 : index
    %c0_27 = arith.constant 0 : index
    %54 = vector.load %arg4[%c0_24, %53, %c0_25, %c0_26, %c0_27] : memref<1x5x8x8x8xf32, #tpu.memory_space<vmem>>, vector<1x1x8x8x8xf32>
    %55 = vector.shape_cast %54 : vector<1x1x8x8x8xf32> to vector<8x8x8xf32>
    %c0_28 = arith.constant 0 : index
    %56 = arith.index_cast %49 : i32 to index
    %57 = arith.index_cast %52 : i32 to index
    %c0_29 = arith.constant 0 : index
    %58 = vector.load %arg6[%c0_28, %56, %57, %c0_29] : memref<1x16x16x8xf32, #tpu.memory_space<vmem>>, vector<1x8x8x8xf32>
    %59 = vector.shape_cast %58 : vector<1x8x8x8xf32> to vector<8x8x8xf32>
    %60 = arith.addf %59, %55 : vector<8x8x8xf32>
    %c0_30 = arith.constant 0 : index
    %61 = arith.index_cast %49 : i32 to index
    %62 = arith.index_cast %52 : i32 to index
    %c0_31 = arith.constant 0 : index
    %63 = vector.load %arg6[%c0_30, %61, %62, %c0_31] : memref<1x16x16x8xf32, #tpu.memory_space<vmem>>, vector<1x8x8x8xf32>
    %64 = vector.shape_cast %63 : vector<1x8x8x8xf32> to vector<8x8x8xf32>
    %65 = vector.shape_cast %60 : vector<8x8x8xf32> to vector<1x8x8x8xf32>
    tpu.vector_store %arg6[%c0_30, %61, %62, %c0_31], %65 {strides = array<i32>} : memref<1x16x16x8xf32, #tpu.memory_space<vmem>>, vector<1x8x8x8xf32>,
    %c3_i32 = arith.constant 3 : i32
    %c5_i32_32 = arith.constant 5 : i32
    %66 = arith.muli %arg2, %c5_i32_32 : i32
    %67 = arith.addi %66, %c3_i32 : i32
    %68 = arith.index_cast %arg0 : i32 to index
    %69 = arith.index_cast %67 : i32 to index
    %c0_33 = arith.constant 0 : index
    %70 = memref.load %arg3[%68, %69, %c0_33] : memref<2x5x2xi32, #tpu.memory_space<smem>>
    %71 = arith.index_cast %arg0 : i32 to index
    %72 = arith.index_cast %67 : i32 to index
    %c1_34 = arith.constant 1 : index
    %73 = memref.load %arg3[%71, %72, %c1_34] : memref<2x5x2xi32, #tpu.memory_space<smem>>
    %c0_35 = arith.constant 0 : index
    %74 = arith.index_cast %c3_i32 : i32 to index
    %c0_36 = arith.constant 0 : index
    %c0_37 = arith.constant 0 : index
    %c0_38 = arith.constant 0 : index
    %75 = vector.load %arg4[%c0_35, %74, %c0_36, %c0_37, %c0_38] : memref<1x5x8x8x8xf32, #tpu.memory_space<vmem>>, vector<1x1x8x8x8xf32>
    %76 = vector.shape_cast %75 : vector<1x1x8x8x8xf32> to vector<8x8x8xf32>
    %c0_39 = arith.constant 0 : index
    %77 = arith.index_cast %70 : i32 to index
    %78 = arith.index_cast %73 : i32 to index
    %c0_40 = arith.constant 0 : index
    %79 = vector.load %arg6[%c0_39, %77, %78, %c0_40] : memref<1x16x16x8xf32, #tpu.memory_space<vmem>>, vector<1x8x8x8xf32>
    %80 = vector.shape_cast %79 : vector<1x8x8x8xf32> to vector<8x8x8xf32>
    %81 = arith.addf %80, %76 : vector<8x8x8xf32>
    %c0_41 = arith.constant 0 : index
    %82 = arith.index_cast %70 : i32 to index
    %83 = arith.index_cast %73 : i32 to index
    %c0_42 = arith.constant 0 : index
    %84 = vector.load %arg6[%c0_41, %82, %83, %c0_42] : memref<1x16x16x8xf32, #tpu.memory_space<vmem>>, vector<1x8x8x8xf32>
    %85 = vector.shape_cast %84 : vector<1x8x8x8xf32> to vector<8x8x8xf32>
    %86 = vector.shape_cast %81 : vector<8x8x8xf32> to vector<1x8x8x8xf32>
    tpu.vector_store %arg6[%c0_41, %82, %83, %c0_42], %86 {strides = array<i32>} : memref<1x16x16x8xf32, #tpu.memory_space<vmem>>, vector<1x8x8x8xf32>,
    %c4_i32 = arith.constant 4 : i32
    %c5_i32_43 = arith.constant 5 : i32
    %87 = arith.muli %arg2, %c5_i32_43 : i32
    %88 = arith.addi %87, %c4_i32 : i32
    %89 = arith.index_cast %arg0 : i32 to index
    %90 = arith.index_cast %88 : i32 to index
    %c0_44 = arith.constant 0 : index
    %91 = memref.load %arg3[%89, %90, %c0_44] : memref<2x5x2xi32, #tpu.memory_space<smem>>
    %92 = arith.index_cast %arg0 : i32 to index
    %93 = arith.index_cast %88 : i32 to index
    %c1_45 = arith.constant 1 : index
    %94 = memref.load %arg3[%92, %93, %c1_45] : memref<2x5x2xi32, #tpu.memory_space<smem>>
    %c0_46 = arith.constant 0 : index
    %95 = arith.index_cast %c4_i32 : i32 to index
    %c0_47 = arith.constant 0 : index
    %c0_48 = arith.constant 0 : index
    %c0_49 = arith.constant 0 : index
    %96 = vector.load %arg4[%c0_46, %95, %c0_47, %c0_48, %c0_49] : memref<1x5x8x8x8xf32, #tpu.memory_space<vmem>>, vector<1x1x8x8x8xf32>
    %97 = vector.shape_cast %96 : vector<1x1x8x8x8xf32> to vector<8x8x8xf32>
    %c0_50 = arith.constant 0 : index
    %98 = arith.index_cast %91 : i32 to index
    %99 = arith.index_cast %94 : i32 to index
    %c0_51 = arith.constant 0 : index
    %100 = vector.load %arg6[%c0_50, %98, %99, %c0_51] : memref<1x16x16x8xf32, #tpu.memory_space<vmem>>, vector<1x8x8x8xf32>
    %101 = vector.shape_cast %100 : vector<1x8x8x8xf32> to vector<8x8x8xf32>
    %102 = arith.addf %101, %97 : vector<8x8x8xf32>
    %c0_52 = arith.constant 0 : index
    %103 = arith.index_cast %91 : i32 to index
    %104 = arith.index_cast %94 : i32 to index
    %c0_53 = arith.constant 0 : index
    %105 = vector.load %arg6[%c0_52, %103, %104, %c0_53] : memref<1x16x16x8xf32, #tpu.memory_space<vmem>>, vector<1x8x8x8xf32>
    %106 = vector.shape_cast %105 : vector<1x8x8x8xf32> to vector<8x8x8xf32>
    %107 = vector.shape_cast %102 : vector<8x8x8xf32> to vector<1x8x8x8xf32>
    tpu.vector_store %arg6[%c0_52, %103, %104, %c0_53], %107 {strides = array<i32>} : memref<1x16x16x8xf32, #tpu.memory_space<vmem>>, vector<1x8x8x8xf32>,
    %c5_i32_54 = arith.constant 5 : i32
    %c0_i32_55 = arith.constant 0 : i32
    %108 = arith.cmpi eq, %arg2, %c0_i32_55 : i32
    %109 = arith.extui %108 : i1 to i32
    %c0_i32_56 = arith.constant 0 : i32
    %110 = arith.cmpi ne, %109, %c0_i32_56 : i32
    scf.if %110 {
      %c0_57 = arith.constant 0 : index
      %c0_58 = arith.constant 0 : index
      %c0_59 = arith.constant 0 : index
      %c0_60 = arith.constant 0 : index
      %111 = vector.load %arg6[%c0_57, %c0_58, %c0_59, %c0_60] : memref<1x16x16x8xf32, #tpu.memory_space<vmem>>, vector<1x16x16x8xf32>
      %c0_61 = arith.constant 0 : index
      %c0_62 = arith.constant 0 : index
      %c0_63 = arith.constant 0 : index
      %c0_64 = arith.constant 0 : index
      %112 = vector.load %arg5[%c0_61, %c0_62, %c0_63, %c0_64] : memref<1x16x16x1xf32, #tpu.memory_space<vmem>>, vector<1x16x16x1xf32>
      %113 = vector.broadcast %112 : vector<1x16x16x1xf32> to vector<1x16x16x8xf32>
      %114 = arith.mulf %111, %113 : vector<1x16x16x8xf32>
      %c0_65 = arith.constant 0 : index
      %c0_66 = arith.constant 0 : index
      %c0_67 = arith.constant 0 : index
      %c0_68 = arith.constant 0 : index
      %115 = vector.load %arg6[%c0_65, %c0_66, %c0_67, %c0_68] : memref<1x16x16x8xf32, #tpu.memory_space<vmem>>, vector<1x16x16x8xf32>
      tpu.vector_store %arg6[%c0_65, %c0_66, %c0_67, %c0_68], %114 {strides = array<i32>} : memref<1x16x16x8xf32, #tpu.memory_space<vmem>>, vector<1x16x16x8xf32>,
    } else {
    }
    return
  }
  func.func @transform_0(%arg0: i32, %arg1: i32, %arg2: i32, %arg3: memref<2x5x2xi32, #tpu.memory_space<smem>>) -> (i32, i32, i32, i32, i32) {
    %c0_i32 = arith.constant 0 : i32
    %c0_i32_0 = arith.constant 0 : i32
    %c0_i32_1 = arith.constant 0 : i32
    return %arg0, %arg2, %c0_i32, %c0_i32_0, %arg1 : i32, i32, i32, i32, i32
  }
  func.func @transform_1(%arg0: i32, %arg1: i32, %arg2: i32, %arg3: memref<2x5x2xi32, #tpu.memory_space<smem>>) -> (i32, i32, i32, i32) {
    %c0_i32 = arith.constant 0 : i32
    %c0_i32_0 = arith.constant 0 : i32
    %c0_i32_1 = arith.constant 0 : i32
    %c0_i32_2 = arith.constant 0 : i32
    return %arg0, %c0_i32, %c0_i32_0, %c0_i32_1 : i32, i32, i32, i32
  }
  func.func @transform_2(%arg0: i32, %arg1: i32, %arg2: i32, %arg3: memref<2x5x2xi32, #tpu.memory_space<smem>>) -> (i32, i32, i32, i32) {
    %c0_i32 = arith.constant 0 : i32
    %c0_i32_0 = arith.constant 0 : i32
    %c0_i32_1 = arith.constant 0 : i32
    return %arg0, %c0_i32, %c0_i32_0, %arg1 : i32, i32, i32, i32
  }
}

</mosaic_0001>

<llo_original>
// kernel: tpu_custom_call.1
$region0: #{tpu_custom_call.1}
  #allocation0 [shape = 'u32[]', space=smem, size = 0x4, offset = 0x4, fixed_abs, tag = 'smem constant byte address 0x4 - core index']
  #allocation1 [shape = 'u32[144,128]{1,0:T(1,128)}', space=vmem, size = 0x12000, scoped, tag = 'internal scratch']
  #allocation2 [shape = 's32[1]{0}', space=sflag, size = 0x4, scoped, tag = 'scoped memory for tpu_custom_call.1']
  #allocation3 [shape = 'u8[8192]{0}', space=smem, size = 0x2000, scoped, tag = 'prefetched SMEM operand 0']
  %s0 = inlined_call_operand.vmem [shape: s32[2,5,2], index: 0, kind: input, shape index: {}]
  %s1 = inlined_call_operand.hbm [shape: f32[2,5,8,8,8], index: 1, kind: input, shape index: {}]
  %s2 = inlined_call_operand.vmem [shape: f32[2,16,16,1], index: 2, kind: input, shape index: {}]
  %s3 = inlined_call_operand.vmem [shape: f32[2,16,16,8], index: 3, kind: output, shape index: {}]
  %s4 = sld [smem:[#allocation0]]
  $region53: #{tpu_custom_call.1} parent=0
    _
  %s6 = ssub.s32 1, %s4
  %s7 = scalar_select 0, %s6, %s4
  %s8 = sshll.u32 %s0, 4
  %s9 = int_to_ptr.vmem [resolvable:$true] %s8
  %11 = dma.vmem_to_smem %s9, 256, [#allocation3], [#allocation2]
  %12 = dma.done [#allocation2], 256
  %13 = sfence
  $region1: #{tpu_custom_call.1} parent=0
    #allocation4 [shape = 'u8[327680]{0}', space=vmem, size = 0x50000, scoped, tag = 'input window, operand 1']
    #allocation5 [shape = 's32[2]{0}', space=sflag, size = 0x8, scoped, tag = 'scoped memory for tpu_custom_call.1']
    %14 = vsyncpa [#allocation5], 0
    %s15 = scalar_lea.sflag [#allocation5], 1
    %16 = vsyncpa %s15, 0
    loop: start=0, step=1, limit=4
    $region2: #{tpu_custom_call.1} parent=1 // loop_pre_header
      _
    $region3: #{tpu_custom_call.1} parent=1 // loop_header
      %s18 = sphi 0, %s22
      %p19 = scmp.ge.s32.totalorder %s18, 4
      %s25 = sphi 0, %s44
      %s26 = sphi 0, %s40
      %s27 = sphi 0, %s36
      %s28 = sphi 0, %s25
      %s29 = sphi 0, %s26
      %s30 = sphi 0, %s27
      %s31 = sphi 0, %s28
      %s32 = sphi 0, %s29
      %s33 = sphi 0, %s30
      %s51 = sphi 0, %s53
      %s54 = sphi 0, %s51
      %s55 = sphi 0, %s54
      %s71 = sphi 0, %s55
      %s77 = sphi 0, %s79
      %s80 = sphi 0, %s77
      %s81 = sphi 0, %s80
      %s97 = sphi 0, %s81
      %s105 = sphi 0, %s107
      %s108 = sphi 0, %s105
      %s109 = sphi 0, %s108
      %s125 = sphi 0, %s109
    $region4: #{tpu_custom_call.1} parent=1 // loop_header_branch
      %21 = sbr.rel (%p19) target = $region8
    $region5: #{tpu_custom_call.1} parent=1 // loop_body
      %s23 = ssub.s32 %s18, 1
      %s24 = ssub.s32 %s18, 2
      %s34 = sadd.s32 1, %s27
      %p35 = scmp.ge.s32.totalorder %s34, 1
      %s36 = scalar_select %p35, 0, %s34
      %s37 = sadd.s32 1, %s26
      %s38 = scalar_select %p35, %s37, %s26
      %p39 = scmp.ge.s32.totalorder %s38, 1
      %s40 = scalar_select %p39, 0, %s38
      %s41 = sadd.s32 1, %s25
      %s42 = scalar_select %p39, %s41, %s25
      %p43 = scmp.ge.s32.totalorder %s42, 2
      %s44 = scalar_select %p43, 0, %s42
      %s45 = ssub.s32 %s25, %s44
      %s46 = ssub.s32 %s27, %s36
      %s47 = sor.u32 %s45, %s46
      %s48 = ssub.s32 %s26, %s40
      %s49 = sor.u32 %s47, %s48
      %p50 = scmp.eq.s32.totalorder %s49, 0
      %s52 = sadd.s32 %s51, 1
      %s53 = scalar_select %p50, %s51, %s52
      %p56 = pneg %p50
      %p57 = scmp.eq.s32.totalorder %s18, 1
      %p58 = por %p56, %p57
      %p59 = scmp.ne.s32.totalorder %s51, %s54
      %p60 = scmp.eq.s32.totalorder %s18, 0
      %p61 = por %p59, %p60
      %p62 = scmp.ne.s32.totalorder %s51, %s54
      %p63 = scmp.eq.s32.totalorder %s23, 1
      %p64 = por %p62, %p63
      %p65 = scmp.ne.s32.totalorder %s54, %s55
      %p66 = scmp.eq.s32.totalorder %s23, 0
      %p67 = por %p65, %p66
      %p68 = scmp.ne.s32.totalorder %s54, %s55
      %p69 = scmp.eq.s32.totalorder %s24, 1
      %p70 = por %p68, %p69
      %p72 = scmp.ne.s32.totalorder %s55, %s71
      %p73 = scmp.eq.s32.totalorder %s24, 0
      %p74 = por %p72, %p73
      %s75 = ssub.s32 %s25, %s44
      %p76 = scmp.eq.s32.totalorder %s75, 0
      %s78 = sadd.s32 %s77, 1
      %s79 = scalar_select %p76, %s77, %s78
      %p82 = pneg %p76
      %p83 = scmp.eq.s32.totalorder %s18, 1
      %p84 = por %p82, %p83
      %p85 = scmp.ne.s32.totalorder %s77, %s80
      %p86 = scmp.eq.s32.totalorder %s18, 0
      %p87 = por %p85, %p86
      %p88 = scmp.ne.s32.totalorder %s77, %s80
      %p89 = scmp.eq.s32.totalorder %s23, 1
      %p90 = por %p88, %p89
      %p91 = scmp.ne.s32.totalorder %s80, %s81
      %p92 = scmp.eq.s32.totalorder %s23, 0
      %p93 = por %p91, %p92
      %p94 = scmp.ne.s32.totalorder %s80, %s81
      %p95 = scmp.eq.s32.totalorder %s24, 1
      %p96 = por %p94, %p95
      %p98 = scmp.ne.s32.totalorder %s81, %s97
      %p99 = scmp.eq.s32.totalorder %s24, 0
      %p100 = por %p98, %p99
      %s101 = ssub.s32 %s25, %s44
      %s102 = ssub.s32 %s26, %s40
      %s103 = sor.u32 %s101, %s102
      %p104 = scmp.eq.s32.totalorder %s103, 0
      %s106 = sadd.s32 %s105, 1
      %s107 = scalar_select %p104, %s105, %s106
      %p110 = pneg %p104
      %p111 = scmp.eq.s32.totalorder %s18, 1
      %p112 = por %p110, %p111
      %p113 = scmp.ne.s32.totalorder %s105, %s108
      %p114 = scmp.eq.s32.totalorder %s18, 0
      %p115 = por %p113, %p114
      %p116 = scmp.ne.s32.totalorder %s105, %s108
      %p117 = scmp.eq.s32.totalorder %s23, 1
      %p118 = por %p116, %p117
      %p119 = scmp.ne.s32.totalorder %s108, %s109
      %p120 = scmp.eq.s32.totalorder %s23, 0
      %p121 = por %p119, %p120
      %p122 = scmp.ne.s32.totalorder %s108, %s109
      %p123 = scmp.eq.s32.totalorder %s24, 1
      %p124 = por %p122, %p123
      %p126 = scmp.ne.s32.totalorder %s109, %s125
      %p127 = scmp.eq.s32.totalorder %s24, 0
      %p128 = por %p126, %p127
      %p129 = scmp.le.s32.totalorder 1, %s18
      %p130 = scmp.lt.s32.totalorder %s18, 3
      %p131 = pnand %p129, %p130
      %p132 = pneg %p131
      // Predicated region
      $region9: #{tpu_custom_call.1} parent=5 // pred_check
        _
      $region10: #{tpu_custom_call.1} parent=5 // pred_check_branch
        %134 = sbr.rel (%p131) target = $region12
      $region11: #{tpu_custom_call.1} parent=5 // pred_region
        %s135 = ssub.s32 %s18, 1
      $region12: #{tpu_custom_call.1} parent=5 // pred_fallthru
        _
      %p136 = scmp.lt.s32.totalorder %s18, 2
      // Predicated region
      $region13: #{tpu_custom_call.1} parent=5 // pred_check
        %p137 = pneg %p136
      $region14: #{tpu_custom_call.1} parent=5 // pred_check_branch
        %139 = sbr.rel (%p137) target = $region16
      $region15: #{tpu_custom_call.1} parent=5 // pred_region
        // Predicated region
        $region17: #{tpu_custom_call.1} parent=15 // pred_check
          %p140 = pneg %p61
        $region18: #{tpu_custom_call.1} parent=15 // pred_check_branch
          %142 = sbr.rel (%p140) target = $region20
        $region19: #{tpu_custom_call.1} parent=15 // pred_region
          %s143 = sand.u32 %s51, 1
          %s144 = scalar_lea.sflag [#allocation5], %s143
          %s145 = sand.u32 %s51, 1
          %s146 = smul.addr %s145, 320
          %s147 = scalar_lea.vmem [#allocation4], %s146
          %s148 = smul.u32 5, %s27
          %s150 = ssub.s32 5120, 5120
          %151 = vsyncadd %s144, %s150
          %s152 = smul.addr %s148, 8
          %s153 = sadd.s32 %s26, %s152
          %s154 = smul.addr %s25, 40
          %s155 = sadd.s32 %s153, %s154
          %s156 = smul.addr %s155, 128
          %s157 = scalar_lea.hbm %s1, %s156
          %s158 = sshll.u32 %s147, 4
          %s159 = int_to_ptr.vmem [resolvable:$true] %s158
          %164 = dma.hbm_to_vmem [thread:$0]  %s157, 5120, %s159, %s144, 128, 128, 8
        $region20: #{tpu_custom_call.1} parent=15 // pred_fallthru
          _
        // Predicated region
        $region21: #{tpu_custom_call.1} parent=15 // pred_check
          %p165 = pneg %p87
        $region22: #{tpu_custom_call.1} parent=15 // pred_check_branch
          %167 = sbr.rel (%p165) target = $region24
        $region23: #{tpu_custom_call.1} parent=15 // pred_region
          %p168 = scmp.lt.s32.totalorder %s25, 1
          %s169 = scalar_select %p168, %s25, 1
          %s170 = smul.addr %s169, 32
          %s171 = smul.addr %s170, 8
          %s172 = scalar_lea.vmem %s2, %s171
        $region24: #{tpu_custom_call.1} parent=15 // pred_fallthru
          _
      $region16: #{tpu_custom_call.1} parent=5 // pred_fallthru
        _
      %p173 = scmp.le.s32.totalorder 1, %s18
      %p174 = scmp.lt.s32.totalorder %s18, 3
      %p175 = pnand %p173, %p174
      %p176 = pneg %p175
      // Predicated region
      $region25: #{tpu_custom_call.1} parent=5 // pred_check
        _
      $region26: #{tpu_custom_call.1} parent=5 // pred_check_branch
        %178 = sbr.rel (%p175) target = $region28
      $region27: #{tpu_custom_call.1} parent=5 // pred_region
        %s179 = ssub.s32 %s18, 1
        %s180 = sand.u32 %s54, 1
        %s181 = scalar_lea.sflag [#allocation5], %s180
        %s182 = sand.u32 %s54, 1
        %s183 = smul.addr %s182, 320
        %s184 = scalar_lea.vmem [#allocation4], %s183
        // Predicated region
        $region29: #{tpu_custom_call.1} parent=27 // pred_check
          %p185 = pneg %p67
        $region30: #{tpu_custom_call.1} parent=27 // pred_check_branch
          %187 = sbr.rel (%p185) target = $region32
        $region31: #{tpu_custom_call.1} parent=27 // pred_region
          %188 = dma.done %s181, 5120
        $region32: #{tpu_custom_call.1} parent=27 // pred_fallthru
          _
        %s189 = sand.u32 %s54, 1
        %s190 = scalar_lea.sflag [#allocation5], %s189
        %s191 = sand.u32 %s54, 1
        %s192 = smul.addr %s191, 320
        %s193 = scalar_lea.vmem [#allocation4], %s192
        %p194 = pneg %p67
        %p195 = pneg %p64
        %p196 = scmp.lt.s32.totalorder %s28, 1
        %s197 = scalar_select %p196, %s28, 1
        %s198 = smul.addr %s197, 32
        %s199 = smul.addr %s198, 8
        %s200 = scalar_lea.vmem %s2, %s199
        %p201 = pneg %p93
        %p202 = pneg %p90
        %p203 = pneg %p121
        %p204 = pneg %p118
        %p205 = scmp.lt.s32.totalorder %s28, 1
        %s206 = scalar_select %p205, %s28, 1
        %p207 = scmp.lt.s32.totalorder %s29, 0
        %s208 = scalar_select %p207, %s29, 0
        %s209 = smul.addr %s206, 32
        %s210 = sadd.s32 %s208, %s209
        %s211 = smul.addr %s210, 8
        %s212 = scalar_lea.vmem %s3, %s211
        %s213 = smul.u32 5, %s30
        %p214 = scmp.lt.s32.totalorder %s28, 1
        %s215 = scalar_select %p214, %s28, 1
        %s216 = smul.addr %s215, 32
        %s217 = smul.addr %s216, 8
        %s218 = scalar_lea.vmem %s2, %s217
        %p219 = scmp.lt.s32.totalorder %s28, 1
        %s220 = scalar_select %p219, %s28, 1
        %p221 = scmp.lt.s32.totalorder %s29, 0
        %s222 = scalar_select %p221, %s29, 0
        %s223 = smul.addr %s220, 32
        %s224 = sadd.s32 %s222, %s223
        %s225 = smul.addr %s224, 8
        %s226 = scalar_lea.vmem %s3, %s225
        %p227 = scmp.eq.s32.totalorder %s30, 0
        // Predicated region
        $region33: #{tpu_custom_call.1} parent=27 // pred_check
          %p228 = pneg %p227
        $region34: #{tpu_custom_call.1} parent=27 // pred_check_branch
          %230 = sbr.rel (%p228) target = $region36
        $region35: #{tpu_custom_call.1} parent=27 // pred_region
          %vm231 = vcmask 64512
          %232 = vst.msk [vmem:[%s226] sm:$0xff] %vm231, 0.0
          %233 = vst.msk [vmem:[%s226 + $0x8] sm:$0xff] %vm231, 0.0
          %234 = vst.msk [vmem:[%s226 + $0x10] sm:$0xff] %vm231, 0.0
          %235 = vst.msk [vmem:[%s226 + $0x18] sm:$0xff] %vm231, 0.0
          %236 = vst.msk [vmem:[%s226 + $0x20] sm:$0xff] %vm231, 0.0
          %237 = vst.msk [vmem:[%s226 + $0x28] sm:$0xff] %vm231, 0.0
          %238 = vst.msk [vmem:[%s226 + $0x30] sm:$0xff] %vm231, 0.0
          %239 = vst.msk [vmem:[%s226 + $0x38] sm:$0xff] %vm231, 0.0
          %240 = vst.msk [vmem:[%s226 + $0x40] sm:$0xff] %vm231, 0.0
          %241 = vst.msk [vmem:[%s226 + $0x48] sm:$0xff] %vm231, 0.0
          %242 = vst.msk [vmem:[%s226 + $0x50] sm:$0xff] %vm231, 0.0
          %243 = vst.msk [vmem:[%s226 + $0x58] sm:$0xff] %vm231, 0.0
          %244 = vst.msk [vmem:[%s226 + $0x60] sm:$0xff] %vm231, 0.0
          %245 = vst.msk [vmem:[%s226 + $0x68] sm:$0xff] %vm231, 0.0
          %246 = vst.msk [vmem:[%s226 + $0x70] sm:$0xff] %vm231, 0.0
          %247 = vst.msk [vmem:[%s226 + $0x78] sm:$0xff] %vm231, 0.0
          %248 = vst.msk [vmem:[%s226 + $0x80] sm:$0xff] %vm231, 0.0
          %249 = vst.msk [vmem:[%s226 + $0x88] sm:$0xff] %vm231, 0.0
          %250 = vst.msk [vmem:[%s226 + $0x90] sm:$0xff] %vm231, 0.0
          %251 = vst.msk [vmem:[%s226 + $0x98] sm:$0xff] %vm231, 0.0
          %252 = vst.msk [vmem:[%s226 + $0xa0] sm:$0xff] %vm231, 0.0
          %253 = vst.msk [vmem:[%s226 + $0xa8] sm:$0xff] %vm231, 0.0
          %254 = vst.msk [vmem:[%s226 + $0xb0] sm:$0xff] %vm231, 0.0
          %255 = vst.msk [vmem:[%s226 + $0xb8] sm:$0xff] %vm231, 0.0
          %256 = vst.msk [vmem:[%s226 + $0xc0] sm:$0xff] %vm231, 0.0
          %257 = vst.msk [vmem:[%s226 + $0xc8] sm:$0xff] %vm231, 0.0
          %258 = vst.msk [vmem:[%s226 + $0xd0] sm:$0xff] %vm231, 0.0
          %259 = vst.msk [vmem:[%s226 + $0xd8] sm:$0xff] %vm231, 0.0
          %260 = vst.msk [vmem:[%s226 + $0xe0] sm:$0xff] %vm231, 0.0
          %261 = vst.msk [vmem:[%s226 + $0xe8] sm:$0xff] %vm231, 0.0
          %262 = vst.msk [vmem:[%s226 + $0xf0] sm:$0xff] %vm231, 0.0
          %263 = vst.msk [vmem:[%s226 + $0xf8] sm:$0xff] %vm231, 0.0
        $region36: #{tpu_custom_call.1} parent=27 // pred_fallthru
          _
        %s264 = smul.u32 %s30, 5
        %s265 = smul.u32 %s28, 8
        %s266 = sadd.s32 %s264, %s265
        %s267 = smul.u32 %s266, 128
        %s268 = sld [smem:[#allocation3 + %s267]]
        %s269 = sadd.s32 %s267, 1
        %s270 = sld [smem:[#allocation3 + %s269]]
        %v271 = vld [vmem:[%s184] sm:$0xff]
        %v272 = vld [vmem:[%s184 + $0x8] sm:$0xff]
        %v273 = vld [vmem:[%s184 + $0x10] sm:$0xff]
        %v274 = vld [vmem:[%s184 + $0x18] sm:$0xff]
        %v275 = vld [vmem:[%s184 + $0x20] sm:$0xff]
        %v276 = vld [vmem:[%s184 + $0x28] sm:$0xff]
        %v277 = vld [vmem:[%s184 + $0x30] sm:$0xff]
        %v278 = vld [vmem:[%s184 + $0x38] sm:$0xff]
        %s279 = smul.u32 %s268, 16
        %s280 = sadd.s32 %s270, %s279
        %s281 = scalar_lea.vmem %s226, %s280
        %v282 = vld [vmem:[%s281] sm:$0xff]
        %v283 = vld [vmem:[%s281 + $0x10] sm:$0xff]
        %v284 = vld [vmem:[%s281 + $0x20] sm:$0xff]
        %v285 = vld [vmem:[%s281 + $0x30] sm:$0xff]
        %v286 = vld [vmem:[%s281 + $0x40] sm:$0xff]
        %v287 = vld [vmem:[%s281 + $0x50] sm:$0xff]
        %v288 = vld [vmem:[%s281 + $0x60] sm:$0xff]
        %v289 = vld [vmem:[%s281 + $0x70] sm:$0xff]
        %v290 = vadd.f32 %v282, %v271
        %v291 = vadd.f32 %v283, %v272
        %v292 = vadd.f32 %v284, %v273
        %v293 = vadd.f32 %v285, %v274
        %v294 = vadd.f32 %v286, %v275
        %v295 = vadd.f32 %v287, %v276
        %v296 = vadd.f32 %v288, %v277
        %v297 = vadd.f32 %v289, %v278
        %vm298 = vcmask 64512
        %299 = vst.msk [vmem:[%s281] sm:$0xff] %vm298, %v290
        %300 = vst.msk [vmem:[%s281 + $0x10] sm:$0xff] %vm298, %v291
        %301 = vst.msk [vmem:[%s281 + $0x20] sm:$0xff] %vm298, %v292
        %302 = vst.msk [vmem:[%s281 + $0x30] sm:$0xff] %vm298, %v293
        %303 = vst.msk [vmem:[%s281 + $0x40] sm:$0xff] %vm298, %v294
        %304 = vst.msk [vmem:[%s281 + $0x50] sm:$0xff] %vm298, %v295
        %305 = vst.msk [vmem:[%s281 + $0x60] sm:$0xff] %vm298, %v296
        %306 = vst.msk [vmem:[%s281 + $0x70] sm:$0xff] %vm298, %v297
        %s307 = sadd.s32 %s264, 1
        %s308 = sadd.s32 %s307, %s265
        %s309 = smul.u32 %s308, 128
        %s310 = sld [smem:[#allocation3 + %s309]]
        %s311 = sadd.s32 %s309, 1
        %s312 = sld [smem:[#allocation3 + %s311]]
        %s313 = scalar_lea.vmem %s184, 64 [#allocation4]
        %v314 = vld [vmem:[%s313] sm:$0xff]
        %v315 = vld [vmem:[%s313 + $0x8] sm:$0xff]
        %v316 = vld [vmem:[%s313 + $0x10] sm:$0xff]
        %v317 = vld [vmem:[%s313 + $0x18] sm:$0xff]
        %v318 = vld [vmem:[%s313 + $0x20] sm:$0xff]
        %v319 = vld [vmem:[%s313 + $0x28] sm:$0xff]
        %v320 = vld [vmem:[%s313 + $0x30] sm:$0xff]
        %v321 = vld [vmem:[%s313 + $0x38] sm:$0xff]
        %s322 = smul.u32 %s310, 16
        %s323 = sadd.s32 %s312, %s322
        %s324 = scalar_lea.vmem %s226, %s323
        %v325 = vld [vmem:[%s324] sm:$0xff]
        %v326 = vld [vmem:[%s324 + $0x10] sm:$0xff]
        %v327 = vld [vmem:[%s324 + $0x20] sm:$0xff]
        %v328 = vld [vmem:[%s324 + $0x30] sm:$0xff]
        %v329 = vld [vmem:[%s324 + $0x40] sm:$0xff]
        %v330 = vld [vmem:[%s324 + $0x50] sm:$0xff]
        %v331 = vld [vmem:[%s324 + $0x60] sm:$0xff]
        %v332 = vld [vmem:[%s324 + $0x70] sm:$0xff]
        %v333 = vadd.f32 %v325, %v314
        %v334 = vadd.f32 %v326, %v315
        %v335 = vadd.f32 %v327, %v316
        %v336 = vadd.f32 %v328, %v317
        %v337 = vadd.f32 %v329, %v318
        %v338 = vadd.f32 %v330, %v319
        %v339 = vadd.f32 %v331, %v320
        %v340 = vadd.f32 %v332, %v321
        %341 = vst.msk [vmem:[%s324] sm:$0xff] %vm298, %v333
        %342 = vst.msk [vmem:[%s324 + $0x10] sm:$0xff] %vm298, %v334
        %343 = vst.msk [vmem:[%s324 + $0x20] sm:$0xff] %vm298, %v335
        %344 = vst.msk [vmem:[%s324 + $0x30] sm:$0xff] %vm298, %v336
        %345 = vst.msk [vmem:[%s324 + $0x40] sm:$0xff] %vm298, %v337
        %346 = vst.msk [vmem:[%s324 + $0x50] sm:$0xff] %vm298, %v338
        %347 = vst.msk [vmem:[%s324 + $0x60] sm:$0xff] %vm298, %v339
        %348 = vst.msk [vmem:[%s324 + $0x70] sm:$0xff] %vm298, %v340
        %s349 = sadd.s32 %s264, 2
        %s350 = sadd.s32 %s349, %s265
        %s351 = smul.u32 %s350, 128
        %s352 = sld [smem:[#allocation3 + %s351]]
        %s353 = sadd.s32 %s351, 1
        %s354 = sld [smem:[#allocation3 + %s353]]
        %s355 = scalar_lea.vmem %s184, 128 [#allocation4]
        %v356 = vld [vmem:[%s355] sm:$0xff]
        %v357 = vld [vmem:[%s355 + $0x8] sm:$0xff]
        %v358 = vld [vmem:[%s355 + $0x10] sm:$0xff]
        %v359 = vld [vmem:[%s355 + $0x18] sm:$0xff]
        %v360 = vld [vmem:[%s355 + $0x20] sm:$0xff]
        %v361 = vld [vmem:[%s355 + $0x28] sm:$0xff]
        %v362 = vld [vmem:[%s355 + $0x30] sm:$0xff]
        %v363 = vld [vmem:[%s355 + $0x38] sm:$0xff]
        %s364 = smul.u32 %s352, 16
        %s365 = sadd.s32 %s354, %s364
        %s366 = scalar_lea.vmem %s226, %s365
        %v367 = vld [vmem:[%s366] sm:$0xff]
        %v368 = vld [vmem:[%s366 + $0x10] sm:$0xff]
        %v369 = vld [vmem:[%s366 + $0x20] sm:$0xff]
        %v370 = vld [vmem:[%s366 + $0x30] sm:$0xff]
        %v371 = vld [vmem:[%s366 + $0x40] sm:$0xff]
        %v372 = vld [vmem:[%s366 + $0x50] sm:$0xff]
        %v373 = vld [vmem:[%s366 + $0x60] sm:$0xff]
        %v374 = vld [vmem:[%s366 + $0x70] sm:$0xff]
        %v375 = vadd.f32 %v367, %v356
        %v376 = vadd.f32 %v368, %v357
        %v377 = vadd.f32 %v369, %v358
        %v378 = vadd.f32 %v370, %v359
        %v379 = vadd.f32 %v371, %v360
        %v380 = vadd.f32 %v372, %v361
        %v381 = vadd.f32 %v373, %v362
        %v382 = vadd.f32 %v374, %v363
        %383 = vst.msk [vmem:[%s366] sm:$0xff] %vm298, %v375
        %384 = vst.msk [vmem:[%s366 + $0x10] sm:$0xff] %vm298, %v376
        %385 = vst.msk [vmem:[%s366 + $0x20] sm:$0xff] %vm298, %v377
        %386 = vst.msk [vmem:[%s366 + $0x30] sm:$0xff] %vm298, %v378
        %387 = vst.msk [vmem:[%s366 + $0x40] sm:$0xff] %vm298, %v379
        %388 = vst.msk [vmem:[%s366 + $0x50] sm:$0xff] %vm298, %v380
        %389 = vst.msk [vmem:[%s366 + $0x60] sm:$0xff] %vm298, %v381
        %390 = vst.msk [vmem:[%s366 + $0x70] sm:$0xff] %vm298, %v382
        %s391 = sadd.s32 %s264, 3
        %s392 = sadd.s32 %s391, %s265
        %s393 = smul.u32 %s392, 128
        %s394 = sld [smem:[#allocation3 + %s393]]
        %s395 = sadd.s32 %s393, 1
        %s396 = sld [smem:[#allocation3 + %s395]]
        %s397 = scalar_lea.vmem %s184, 192 [#allocation4]
        %v398 = vld [vmem:[%s397] sm:$0xff]
        %v399 = vld [vmem:[%s397 + $0x8] sm:$0xff]
        %v400 = vld [vmem:[%s397 + $0x10] sm:$0xff]
        %v401 = vld [vmem:[%s397 + $0x18] sm:$0xff]
        %v402 = vld [vmem:[%s397 + $0x20] sm:$0xff]
        %v403 = vld [vmem:[%s397 + $0x28] sm:$0xff]
        %v404 = vld [vmem:[%s397 + $0x30] sm:$0xff]
        %v405 = vld [vmem:[%s397 + $0x38] sm:$0xff]
        %s406 = smul.u32 %s394, 16
        %s407 = sadd.s32 %s396, %s406
        %s408 = scalar_lea.vmem %s226, %s407
        %v409 = vld [vmem:[%s408] sm:$0xff]
        %v410 = vld [vmem:[%s408 + $0x10] sm:$0xff]
        %v411 = vld [vmem:[%s408 + $0x20] sm:$0xff]
        %v412 = vld [vmem:[%s408 + $0x30] sm:$0xff]
        %v413 = vld [vmem:[%s408 + $0x40] sm:$0xff]
        %v414 = vld [vmem:[%s408 + $0x50] sm:$0xff]
        %v415 = vld [vmem:[%s408 + $0x60] sm:$0xff]
        %v416 = vld [vmem:[%s408 + $0x70] sm:$0xff]
        %v417 = vadd.f32 %v409, %v398
        %v418 = vadd.f32 %v410, %v399
        %v419 = vadd.f32 %v411, %v400
        %v420 = vadd.f32 %v412, %v401
        %v421 = vadd.f32 %v413, %v402
        %v422 = vadd.f32 %v414, %v403
        %v423 = vadd.f32 %v415, %v404
        %v424 = vadd.f32 %v416, %v405
        %425 = vst.msk [vmem:[%s408] sm:$0xff] %vm298, %v417
        %426 = vst.msk [vmem:[%s408 + $0x10] sm:$0xff] %vm298, %v418
        %427 = vst.msk [vmem:[%s408 + $0x20] sm:$0xff] %vm298, %v419
        %428 = vst.msk [vmem:[%s408 + $0x30] sm:$0xff] %vm298, %v420
        %429 = vst.msk [vmem:[%s408 + $0x40] sm:$0xff] %vm298, %v421
        %430 = vst.msk [vmem:[%s408 + $0x50] sm:$0xff] %vm298, %v422
        %431 = vst.msk [vmem:[%s408 + $0x60] sm:$0xff] %vm298, %v423
        %432 = vst.msk [vmem:[%s408 + $0x70] sm:$0xff] %vm298, %v424
        %s433 = sadd.s32 %s264, 4
        %s434 = sadd.s32 %s433, %s265
        %s435 = smul.u32 %s434, 128
        %s436 = sld [smem:[#allocation3 + %s435]]
        %s437 = sadd.s32 %s435, 1
        %s438 = sld [smem:[#allocation3 + %s437]]
        %s439 = scalar_lea.vmem %s184, 256 [#allocation4]
        %v440 = vld [vmem:[%s439] sm:$0xff]
        %v441 = vld [vmem:[%s439 + $0x8] sm:$0xff]
        %v442 = vld [vmem:[%s439 + $0x10] sm:$0xff]
        %v443 = vld [vmem:[%s439 + $0x18] sm:$0xff]
        %v444 = vld [vmem:[%s439 + $0x20] sm:$0xff]
        %v445 = vld [vmem:[%s439 + $0x28] sm:$0xff]
        %v446 = vld [vmem:[%s439 + $0x30] sm:$0xff]
        %v447 = vld [vmem:[%s439 + $0x38] sm:$0xff]
        %s448 = smul.u32 %s436, 16
        %s449 = sadd.s32 %s438, %s448
        %s450 = scalar_lea.vmem %s226, %s449
        %v451 = vld [vmem:[%s450] sm:$0xff]
        %v452 = vld [vmem:[%s450 + $0x10] sm:$0xff]
        %v453 = vld [vmem:[%s450 + $0x20] sm:$0xff]
        %v454 = vld [vmem:[%s450 + $0x30] sm:$0xff]
        %v455 = vld [vmem:[%s450 + $0x40] sm:$0xff]
        %v456 = vld [vmem:[%s450 + $0x50] sm:$0xff]
        %v457 = vld [vmem:[%s450 + $0x60] sm:$0xff]
        %v458 = vld [vmem:[%s450 + $0x70] sm:$0xff]
        %v459 = vadd.f32 %v451, %v440
        %v460 = vadd.f32 %v452, %v441
        %v461 = vadd.f32 %v453, %v442
        %v462 = vadd.f32 %v454, %v443
        %v463 = vadd.f32 %v455, %v444
        %v464 = vadd.f32 %v456, %v445
        %v465 = vadd.f32 %v457, %v446
        %v466 = vadd.f32 %v458, %v447
        %467 = vst.msk [vmem:[%s450] sm:$0xff] %vm298, %v459
        %468 = vst.msk [vmem:[%s450 + $0x10] sm:$0xff] %vm298, %v460
        %469 = vst.msk [vmem:[%s450 + $0x20] sm:$0xff] %vm298, %v461
        %470 = vst.msk [vmem:[%s450 + $0x30] sm:$0xff] %vm298, %v462
        %471 = vst.msk [vmem:[%s450 + $0x40] sm:$0xff] %vm298, %v463
        %472 = vst.msk [vmem:[%s450 + $0x50] sm:$0xff] %vm298, %v464
        %473 = vst.msk [vmem:[%s450 + $0x60] sm:$0xff] %vm298, %v465
        %474 = vst.msk [vmem:[%s450 + $0x70] sm:$0xff] %vm298, %v466
        // Predicated region
        $region37: #{tpu_custom_call.1} parent=27 // pred_check
          %p475 = pneg %p227
        $region38: #{tpu_custom_call.1} parent=27 // pred_check_branch
          %477 = sbr.rel (%p475) target = $region40
        $region39: #{tpu_custom_call.1} parent=27 // pred_region
          %v478 = vld [vmem:[%s226] sm:$0xff]
          %v479 = vld [vmem:[%s226 + $0x8] sm:$0xff]
          %v480 = vld [vmem:[%s226 + $0x10] sm:$0xff]
          %v481 = vld [vmem:[%s226 + $0x18] sm:$0xff]
          %v482 = vld [vmem:[%s226 + $0x20] sm:$0xff]
          %v483 = vld [vmem:[%s226 + $0x28] sm:$0xff]
          %v484 = vld [vmem:[%s226 + $0x30] sm:$0xff]
          %v485 = vld [vmem:[%s226 + $0x38] sm:$0xff]
          %v486 = vld [vmem:[%s226 + $0x40] sm:$0xff]
          %v487 = vld [vmem:[%s226 + $0x48] sm:$0xff]
          %v488 = vld [vmem:[%s226 + $0x50] sm:$0xff]
          %v489 = vld [vmem:[%s226 + $0x58] sm:$0xff]
          %v490 = vld [vmem:[%s226 + $0x60] sm:$0xff]
          %v491 = vld [vmem:[%s226 + $0x68] sm:$0xff]
          %v492 = vld [vmem:[%s226 + $0x70] sm:$0xff]
          %v493 = vld [vmem:[%s226 + $0x78] sm:$0xff]
          %v494 = vld [vmem:[%s226 + $0x80] sm:$0xff]
          %v495 = vld [vmem:[%s226 + $0x88] sm:$0xff]
          %v496 = vld [vmem:[%s226 + $0x90] sm:$0xff]
          %v497 = vld [vmem:[%s226 + $0x98] sm:$0xff]
          %v498 = vld [vmem:[%s226 + $0xa0] sm:$0xff]
          %v499 = vld [vmem:[%s226 + $0xa8] sm:$0xff]
          %v500 = vld [vmem:[%s226 + $0xb0] sm:$0xff]
          %v501 = vld [vmem:[%s226 + $0xb8] sm:$0xff]
          %v502 = vld [vmem:[%s226 + $0xc0] sm:$0xff]
          %v503 = vld [vmem:[%s226 + $0xc8] sm:$0xff]
          %v504 = vld [vmem:[%s226 + $0xd0] sm:$0xff]
          %v505 = vld [vmem:[%s226 + $0xd8] sm:$0xff]
          %v506 = vld [vmem:[%s226 + $0xe0] sm:$0xff]
          %v507 = vld [vmem:[%s226 + $0xe8] sm:$0xff]
          %v508 = vld [vmem:[%s226 + $0xf0] sm:$0xff]
          %v509 = vld [vmem:[%s226 + $0xf8] sm:$0xff]
          %v510 = vld [vmem:[%s218] sm:$0xff]
          %v511 = vld [vmem:[%s218 + $0x8] sm:$0xff]
          %v512 = vld [vmem:[%s218 + $0x10] sm:$0xff]
          %v513 = vld [vmem:[%s218 + $0x18] sm:$0xff]
          %v514 = vld [vmem:[%s218 + $0x20] sm:$0xff]
          %v515 = vld [vmem:[%s218 + $0x28] sm:$0xff]
          %v516 = vld [vmem:[%s218 + $0x30] sm:$0xff]
          %v517 = vld [vmem:[%s218 + $0x38] sm:$0xff]
          %v518 = vld [vmem:[%s218 + $0x40] sm:$0xff]
          %v519 = vld [vmem:[%s218 + $0x48] sm:$0xff]
          %v520 = vld [vmem:[%s218 + $0x50] sm:$0xff]
          %v521 = vld [vmem:[%s218 + $0x58] sm:$0xff]
          %v522 = vld [vmem:[%s218 + $0x60] sm:$0xff]
          %v523 = vld [vmem:[%s218 + $0x68] sm:$0xff]
          %v524 = vld [vmem:[%s218 + $0x70] sm:$0xff]
          %v525 = vld [vmem:[%s218 + $0x78] sm:$0xff]
          %v526 = vld [vmem:[%s218 + $0x80] sm:$0xff]
          %v527 = vld [vmem:[%s218 + $0x88] sm:$0xff]
          %v528 = vld [vmem:[%s218 + $0x90] sm:$0xff]
          %v529 = vld [vmem:[%s218 + $0x98] sm:$0xff]
          %v530 = vld [vmem:[%s218 + $0xa0] sm:$0xff]
          %v531 = vld [vmem:[%s218 + $0xa8] sm:$0xff]
          %v532 = vld [vmem:[%s218 + $0xb0] sm:$0xff]
          %v533 = vld [vmem:[%s218 + $0xb8] sm:$0xff]
          %v534 = vld [vmem:[%s218 + $0xc0] sm:$0xff]
          %v535 = vld [vmem:[%s218 + $0xc8] sm:$0xff]
          %v536 = vld [vmem:[%s218 + $0xd0] sm:$0xff]
          %v537 = vld [vmem:[%s218 + $0xd8] sm:$0xff]
          %v538 = vld [vmem:[%s218 + $0xe0] sm:$0xff]
          %v539 = vld [vmem:[%s218 + $0xe8] sm:$0xff]
          %v540 = vld [vmem:[%s218 + $0xf0] sm:$0xff]
          %v541 = vld [vmem:[%s218 + $0xf8] sm:$0xff]
          %543 = vset.pattern.permute.xlu0 0
          %544 = vperm.xlu0 %543, %v510
          %v545 = vpop.permute.xlu0 %544
          %548 = vset.pattern.permute.xlu0 0
          %549 = vperm.xlu0 %548, %v511
          %v550 = vpop.permute.xlu0 %549
          %553 = vset.pattern.permute.xlu0 0
          %554 = vperm.xlu0 %553, %v512
          %v555 = vpop.permute.xlu0 %554
          %558 = vset.pattern.permute.xlu0 0
          %559 = vperm.xlu0 %558, %v513
          %v560 = vpop.permute.xlu0 %559
          %563 = vset.pattern.permute.xlu0 0
          %564 = vperm.xlu0 %563, %v514
          %v565 = vpop.permute.xlu0 %564
          %568 = vset.pattern.permute.xlu0 0
          %569 = vperm.xlu0 %568, %v515
          %v570 = vpop.permute.xlu0 %569
          %573 = vset.pattern.permute.xlu0 0
          %574 = vperm.xlu0 %573, %v516
          %v575 = vpop.permute.xlu0 %574
          %578 = vset.pattern.permute.xlu0 0
          %579 = vperm.xlu0 %578, %v517
          %v580 = vpop.permute.xlu0 %579
          %583 = vset.pattern.permute.xlu0 0
          %584 = vperm.xlu0 %583, %v518
          %v585 = vpop.permute.xlu0 %584
          %588 = vset.pattern.permute.xlu0 0
          %589 = vperm.xlu0 %588, %v519
          %v590 = vpop.permute.xlu0 %589
          %593 = vset.pattern.permute.xlu0 0
          %594 = vperm.xlu0 %593, %v520
          %v595 = vpop.permute.xlu0 %594
          %598 = vset.pattern.permute.xlu0 0
          %599 = vperm.xlu0 %598, %v521
          %v600 = vpop.permute.xlu0 %599
          %603 = vset.pattern.permute.xlu0 0
          %604 = vperm.xlu0 %603, %v522
          %v605 = vpop.permute.xlu0 %604
          %608 = vset.pattern.permute.xlu0 0
          %609 = vperm.xlu0 %608, %v523
          %v610 = vpop.permute.xlu0 %609
          %613 = vset.pattern.permute.xlu0 0
          %614 = vperm.xlu0 %613, %v524
          %v615 = vpop.permute.xlu0 %614
          %618 = vset.pattern.permute.xlu0 0
          %619 = vperm.xlu0 %618, %v525
          %v620 = vpop.permute.xlu0 %619
          %623 = vset.pattern.permute.xlu0 0
          %624 = vperm.xlu0 %623, %v526
          %v625 = vpop.permute.xlu0 %624
          %628 = vset.pattern.permute.xlu0 0
          %629 = vperm.xlu0 %628, %v527
          %v630 = vpop.permute.xlu0 %629
          %633 = vset.pattern.permute.xlu0 0
          %634 = vperm.xlu0 %633, %v528
          %v635 = vpop.permute.xlu0 %634
          %638 = vset.pattern.permute.xlu0 0
          %639 = vperm.xlu0 %638, %v529
          %v640 = vpop.permute.xlu0 %639
          %643 = vset.pattern.permute.xlu0 0
          %644 = vperm.xlu0 %643, %v530
          %v645 = vpop.permute.xlu0 %644
          %648 = vset.pattern.permute.xlu0 0
          %649 = vperm.xlu0 %648, %v531
          %v650 = vpop.permute.xlu0 %649
          %653 = vset.pattern.permute.xlu0 0
          %654 = vperm.xlu0 %653, %v532
          %v655 = vpop.permute.xlu0 %654
          %658 = vset.pattern.permute.xlu0 0
          %659 = vperm.xlu0 %658, %v533
          %v660 = vpop.permute.xlu0 %659
          %663 = vset.pattern.permute.xlu0 0
          %664 = vperm.xlu0 %663, %v534
          %v665 = vpop.permute.xlu0 %664
          %668 = vset.pattern.permute.xlu0 0
          %669 = vperm.xlu0 %668, %v535
          %v670 = vpop.permute.xlu0 %669
          %673 = vset.pattern.permute.xlu0 0
          %674 = vperm.xlu0 %673, %v536
          %v675 = vpop.permute.xlu0 %674
          %678 = vset.pattern.permute.xlu0 0
          %679 = vperm.xlu0 %678, %v537
          %v680 = vpop.permute.xlu0 %679
          %683 = vset.pattern.permute.xlu0 0
          %684 = vperm.xlu0 %683, %v538
          %v685 = vpop.permute.xlu0 %684
          %688 = vset.pattern.permute.xlu0 0
          %689 = vperm.xlu0 %688, %v539
          %v690 = vpop.permute.xlu0 %689
          %693 = vset.pattern.permute.xlu0 0
          %694 = vperm.xlu0 %693, %v540
          %v695 = vpop.permute.xlu0 %694
          %698 = vset.pattern.permute.xlu0 0
          %699 = vperm.xlu0 %698, %v541
          %v700 = vpop.permute.xlu0 %699
          %v702 = vmul.f32 %v478, %v545
          %v703 = vmul.f32 %v479, %v550
          %v704 = vmul.f32 %v480, %v555
          %v705 = vmul.f32 %v481, %v560
          %v706 = vmul.f32 %v482, %v565
          %v707 = vmul.f32 %v483, %v570
          %v708 = vmul.f32 %v484, %v575
          %v709 = vmul.f32 %v485, %v580
          %v710 = vmul.f32 %v486, %v585
          %v711 = vmul.f32 %v487, %v590
          %v712 = vmul.f32 %v488, %v595
          %v713 = vmul.f32 %v489, %v600
          %v714 = vmul.f32 %v490, %v605
          %v715 = vmul.f32 %v491, %v610
          %v716 = vmul.f32 %v492, %v615
          %v717 = vmul.f32 %v493, %v620
          %v718 = vmul.f32 %v494, %v625
          %v719 = vmul.f32 %v495, %v630
          %v720 = vmul.f32 %v496, %v635
          %v721 = vmul.f32 %v497, %v640
          %v722 = vmul.f32 %v498, %v645
          %v723 = vmul.f32 %v499, %v650
          %v724 = vmul.f32 %v500, %v655
          %v725 = vmul.f32 %v501, %v660
          %v726 = vmul.f32 %v502, %v665
          %v727 = vmul.f32 %v503, %v670
          %v728 = vmul.f32 %v504, %v675
          %v729 = vmul.f32 %v505, %v680
          %v730 = vmul.f32 %v506, %v685
          %v731 = vmul.f32 %v507, %v690
          %v732 = vmul.f32 %v508, %v695
          %v733 = vmul.f32 %v509, %v700
          %734 = vst.msk [vmem:[%s226] sm:$0xff] %vm298, %v702
          %735 = vst.msk [vmem:[%s226 + $0x8] sm:$0xff] %vm298, %v703
          %736 = vst.msk [vmem:[%s226 + $0x10] sm:$0xff] %vm298, %v704
          %737 = vst.msk [vmem:[%s226 + $0x18] sm:$0xff] %vm298, %v705
          %738 = vst.msk [vmem:[%s226 + $0x20] sm:$0xff] %vm298, %v706
          %739 = vst.msk [vmem:[%s226 + $0x28] sm:$0xff] %vm298, %v707
          %740 = vst.msk [vmem:[%s226 + $0x30] sm:$0xff] %vm298, %v708
          %741 = vst.msk [vmem:[%s226 + $0x38] sm:$0xff] %vm298, %v709
          %742 = vst.msk [vmem:[%s226 + $0x40] sm:$0xff] %vm298, %v710
          %743 = vst.msk [vmem:[%s226 + $0x48] sm:$0xff] %vm298, %v711
          %744 = vst.msk [vmem:[%s226 + $0x50] sm:$0xff] %vm298, %v712
          %745 = vst.msk [vmem:[%s226 + $0x58] sm:$0xff] %vm298, %v713
          %746 = vst.msk [vmem:[%s226 + $0x60] sm:$0xff] %vm298, %v714
          %747 = vst.msk [vmem:[%s226 + $0x68] sm:$0xff] %vm298, %v715
          %748 = vst.msk [vmem:[%s226 + $0x70] sm:$0xff] %vm298, %v716
          %749 = vst.msk [vmem:[%s226 + $0x78] sm:$0xff] %vm298, %v717
          %750 = vst.msk [vmem:[%s226 + $0x80] sm:$0xff] %vm298, %v718
          %751 = vst.msk [vmem:[%s226 + $0x88] sm:$0xff] %vm298, %v719
          %752 = vst.msk [vmem:[%s226 + $0x90] sm:$0xff] %vm298, %v720
          %753 = vst.msk [vmem:[%s226 + $0x98] sm:$0xff] %vm298, %v721
          %754 = vst.msk [vmem:[%s226 + $0xa0] sm:$0xff] %vm298, %v722
          %755 = vst.msk [vmem:[%s226 + $0xa8] sm:$0xff] %vm298, %v723
          %756 = vst.msk [vmem:[%s226 + $0xb0] sm:$0xff] %vm298, %v724
          %757 = vst.msk [vmem:[%s226 + $0xb8] sm:$0xff] %vm298, %v725
          %758 = vst.msk [vmem:[%s226 + $0xc0] sm:$0xff] %vm298, %v726
          %759 = vst.msk [vmem:[%s226 + $0xc8] sm:$0xff] %vm298, %v727
          %760 = vst.msk [vmem:[%s226 + $0xd0] sm:$0xff] %vm298, %v728
          %761 = vst.msk [vmem:[%s226 + $0xd8] sm:$0xff] %vm298, %v729
          %762 = vst.msk [vmem:[%s226 + $0xe0] sm:$0xff] %vm298, %v730
          %763 = vst.msk [vmem:[%s226 + $0xe8] sm:$0xff] %vm298, %v731
          %764 = vst.msk [vmem:[%s226 + $0xf0] sm:$0xff] %vm298, %v732
          %765 = vst.msk [vmem:[%s226 + $0xf8] sm:$0xff] %vm298, %v733
        $region40: #{tpu_custom_call.1} parent=27 // pred_fallthru
          _
        %p766 = scmp.lt.s32.totalorder %s28, 1
        %s767 = scalar_select %p766, %s28, 1
        %p768 = scmp.lt.s32.totalorder %s29, 0
        %s769 = scalar_select %p768, %s29, 0
        %s770 = smul.addr %s767, 32
        %s771 = sadd.s32 %s769, %s770
        %s772 = smul.addr %s771, 8
        %s773 = scalar_lea.vmem %s3, %s772
        // Predicated region
        $region41: #{tpu_custom_call.1} parent=27 // pred_check
          %p774 = pneg %p118
        $region42: #{tpu_custom_call.1} parent=27 // pred_check_branch
          %776 = sbr.rel (%p774) target = $region44
        $region43: #{tpu_custom_call.1} parent=27 // pred_region
          _
        $region44: #{tpu_custom_call.1} parent=27 // pred_fallthru
          _
      $region28: #{tpu_custom_call.1} parent=5 // pred_fallthru
        _
      %p777 = scmp.le.s32.totalorder 2, %s18
      // Predicated region
      $region45: #{tpu_custom_call.1} parent=5 // pred_check
        %p778 = pneg %p777
      $region46: #{tpu_custom_call.1} parent=5 // pred_check_branch
        %780 = sbr.rel (%p778) target = $region48
      $region47: #{tpu_custom_call.1} parent=5 // pred_region
        %s781 = ssub.s32 %s18, 2
        // Predicated region
        $region49: #{tpu_custom_call.1} parent=47 // pred_check
          %p782 = pneg %p124
        $region50: #{tpu_custom_call.1} parent=47 // pred_check_branch
          %784 = sbr.rel (%p782) target = $region52
        $region51: #{tpu_custom_call.1} parent=47 // pred_region
          %p785 = scmp.lt.s32.totalorder %s31, 1
          %s786 = scalar_select %p785, %s31, 1
          %p787 = scmp.lt.s32.totalorder %s32, 0
          %s788 = scalar_select %p787, %s32, 0
          %s789 = smul.addr %s786, 32
          %s790 = sadd.s32 %s788, %s789
          %s791 = smul.addr %s790, 8
          %s792 = scalar_lea.vmem %s3, %s791
        $region52: #{tpu_custom_call.1} parent=47 // pred_fallthru
          _
      $region48: #{tpu_custom_call.1} parent=5 // pred_fallthru
        _
    $region6: #{tpu_custom_call.1} parent=1 // loop_footer
      %s22 = sadd.s32 1, %s18
    $region7: #{tpu_custom_call.1} parent=1 // loop_footer_branch
      %17 = sbr.rel target = $region3
    $region8: #{tpu_custom_call.1} parent=1 // loop_exit
      _
    %793 = vsyncpa [#allocation5], 1
    %s794 = scalar_lea.sflag [#allocation5], 1
    %795 = vsyncpa %s794, 1

</llo_original>
